<compile_context>
chip_gen: v5e
topology: v5e:2x2
jax: 0.10.0
libtpu: 0.0.40
codegen_flags: <defaults>
</compile_context>

<pallas_src>
import functools

import jax
import jax.numpy as jnp
from jax import lax
from jax.experimental import pallas as pl
from jax.experimental.pallas import tpu as pltpu


_BF16_SUBLANE = 16   # bf16 sublane packing: one vreg row-group holds 16 rows


def make_divisible(v, divisor=8, min_value=None, round_limit=0.9):
    min_value = min_value or divisor
    new_v = max(min_value, int(v + divisor / 2) // divisor * divisor)
    if new_v < round_limit * v:
        new_v += divisor
    return new_v


def _round_up(v, m):
    return ((v + m - 1) // m) * m


def _choose_nb(N, cap=8):
    """Largest divisor of N (<= cap) that keeps the grid length >= 2 (v7x megacore)."""
    best = 1
    for nb in range(1, min(N, cap) + 1):
        if N % nb == 0 and (N // nb >= 2 or N == 1):
            best = nb
    return best


def _fold_bn_params(params, kernel_size):
    """Fold BN scales into conv weights -> bf16 matmul weights + f32 column biases.

    conv_exp weight (K,K,Cin,Chid) -> weight-stationary (Chid, K*K*Cin_pad) with the
    contraction ordered (dy, dx, cin_padded) to match the in-kernel patch assembly.
    Cin is padded up to the bf16 sublane tile so every im2col tap slab is sublane
    aligned; the extra zero rows are free on the MXU.
    """
    w1, s1, b1, w2, s2, b2 = params          # w1: (K,K,Cin,Chid), w2: (Chid,Cout)
    K = kernel_size
    Cin, Chid = w1.shape[2], w1.shape[3]
    Cout = w2.shape[-1]
    Cin_pad = _round_up(Cin, _BF16_SUBLANE)
    w1s = w1 * s1[None, None, None, :]
    w1s = jnp.pad(w1s, ((0, 0), (0, 0), (0, Cin_pad - Cin), (0, 0)))
    w1f = w1s.transpose(3, 0, 1, 2).reshape(Chid, K * K * Cin_pad)
    w2f = (w2 * s2[None, :]).T               # (Cout, Chid)
    return (w1f.astype(jnp.bfloat16),
            b1.reshape(Chid, 1).astype(jnp.float32),
            w2f.astype(jnp.bfloat16),
            b2.reshape(Cout, 1).astype(jnp.float32),
            Cin_pad)


def _fused_mbconv_kernel(x_ref, w1_ref, b1_ref, w2_ref, b2_ref, o_ref, xpad_ref,
                         *, H, W, K, pad, Cin, Cin_pad, has_residual):
    """Nb batch images per grid step, weight-stationary lane-dense (C, H*W) layout.

    x_ref:    (Nb, Cin, H*W) f32          -- raw input block (read from HBM exactly once)
    w1_ref:   (Chid, K*K*Cin_pad) bf16    -- BN1 scale folded in, Cin padded to sublane
    b1_ref:   (Chid, 1) f32
    w2_ref:   (Cout, Chid) bf16           -- BN2 scale folded in
    b2_ref:   (Cout, 1) f32
    o_ref:    (Nb, Cout, H*W) f32         -- lane-dense unmasked stores
    xpad_ref: (Nb, Cin_pad, H*W + 2*PADE) bf16 VMEM scratch (in-kernel halo pad + cast)
    """
    Nb = x_ref.shape[0]
    Cout = o_ref.shape[1]
    HW = H * W
    PADE = pad * (W + 1)

    # In-kernel zero-pad + f32->bf16 cast (replaces the old host-side pad/cast HBM pass).
    # Zeroing the whole scratch each step keeps the halo and the padded channel rows
    # valid no matter how the "parallel" grid axis is sharded across TensorCores.
    xpad_ref[...] = jnp.zeros_like(xpad_ref)
    for b in range(Nb):
        xpad_ref[b, :Cin, PADE:PADE + HW] = x_ref[b].astype(jnp.bfloat16)

    # dx boundary masks, hoisted out of the K*K tap loop: one compare per distinct ox,
    # reused across all dy and all images.
    col = lax.broadcasted_iota(jnp.int32, (Cin_pad, HW), 1) % W
    zeros_t = jnp.zeros((Cin_pad, HW), jnp.bfloat16)
    masks = {}
    for dx in range(K):
        ox = dx - pad
        if ox > 0:
            masks[ox] = col < (W - ox)
        elif ox < 0:
            masks[ox] = col >= (-ox)

    # im2col patch matrix: every tap is ONE contiguous static lane slice of the 1-D
    # zero-padded flat input (row/dy violations fall into the halo automatically; column
    # /dx violations use the hoisted masks).  Images are concatenated along lanes so one
    # MXU matmul streams Nb*HW columns against the stationary weights.
    tap_cols = []
    for b in range(Nb):
        taps = []
        for dy in range(K):
            oy = dy - pad
            for dx in range(K):
                ox = dx - pad
                off = PADE + oy * W + ox              # static, in [0, 2*PADE]
                t = xpad_ref[b, :, off:off + HW]      # (Cin_pad, HW) bf16, sublane aligned
                if ox != 0:
                    t = jnp.where(masks[ox], t, zeros_t)
                taps.append(t)
        tap_cols.append(jnp.concatenate(taps, axis=0))        # (K*K*Cin_pad, HW)
    patches = jnp.concatenate(tap_cols, axis=1) if Nb > 1 else tap_cols[0]

    # conv_exp (+ folded BN1): one bf16 MXU matmul, f32 accumulation; bias + ReLU.
    h = jnp.dot(w1_ref[...], patches, preferred_element_type=jnp.float32)  # (Chid, Nb*HW)
    h = jnp.maximum(h + b1_ref[...], 0.0)

    # SE layer is Identity (se_layer=False).
    # conv_pwl (1x1, + folded BN2): second bf16 MXU matmul, f32 accumulation; bias.
    y = jnp.dot(w2_ref[...], h.astype(jnp.bfloat16),
                preferred_element_type=jnp.float32)            # (Cout, Nb*HW)
    y = y + b2_ref[...]

    if has_residual:
        # Residual = center-tap rows of the already-assembled patch matrix (no extra
        # DMA, no extra slicing work); Cin == Cout when has_residual.
        ctr = (pad * K + pad) * Cin_pad
        y = y + patches[ctr:ctr + Cout, :].astype(jnp.float32)

    # Lane-dense per-image stores (each (Cout, HW) slab; HW a multiple of 128 here).
    for b in range(Nb):
        o_ref[b] = y[:, b * HW:(b + 1) * HW]


def fused_mbconv(x_nchw, params, *, kernel_size, stride, padding):
    assert stride == 1, "kernel implements stride=1 only"
    w1, s1, b1, w2, s2, b2 = params
    N, Cin, H, W = x_nchw.shape
    K = kernel_size
    Chid = w1.shape[-1]
    Cout = w2.shape[-1]
    has_residual = (Cin == Cout) and (stride == 1)

    HW = H * W
    PADE = padding * (W + 1)
    HWE = HW + 2 * PADE
    Nb = _choose_nb(N)

    w1_bf, b1c, w2_bf, b2c, Cin_pad = _fold_bn_params(params, K)

    # NCHW -> (N, Cin, H*W) is a free reshape of trailing contiguous dims; no pad, no
    # cast, no transpose on the host side -- x is read from HBM exactly once.
    x_flat = x_nchw.reshape(N, Cin, HW)

    kernel = functools.partial(_fused_mbconv_kernel, H=H, W=W, K=K, pad=padding,
                               Cin=Cin, Cin_pad=Cin_pad, has_residual=has_residual)

    flops = 2 * N * HW * (Chid * K * K * Cin + Cout * Chid)
    bytes_accessed = (x_flat.size * 4 + N * Cout * HW * 4
                      + w1_bf.size * 2 + w2_bf.size * 2 + (Chid + Cout) * 4)

    out_flat = pl.pallas_call(
        kernel,
        out_shape=jax.ShapeDtypeStruct((N, Cout, HW), jnp.float32),
        grid=(N // Nb,),
        in_specs=[
            pl.BlockSpec((Nb, Cin, HW), lambda b: (b, 0, 0)),
            pl.BlockSpec((Chid, K * K * Cin_pad), lambda b: (0, 0)),
            pl.BlockSpec((Chid, 1), lambda b: (0, 0)),
            pl.BlockSpec((Cout, Chid), lambda b: (0, 0)),
            pl.BlockSpec((Cout, 1), lambda b: (0, 0)),
        ],
        out_specs=pl.BlockSpec((Nb, Cout, HW), lambda b: (b, 0, 0)),
        scratch_shapes=[pltpu.VMEM((Nb, Cin_pad, HWE), jnp.bfloat16)],
        compiler_params=pltpu.CompilerParams(
            dimension_semantics=("parallel",)),
        cost_estimate=pl.CostEstimate(flops=flops, transcendentals=0,
                                      bytes_accessed=bytes_accessed),
    )(x_flat, w1_bf, b1c, w2_bf, b2c)

    return out_flat.reshape(N, Cout, H, W)  # free reshape back to NCHW


def _reference_forward(x, params, *, kernel_size, stride, padding):
    """Independent pure-JAX reference (XLA conv) with the same BN folding and the same
    bf16 operand roundings as the kernel (bf16 operands, f32 accumulation)."""
    w1, s1, b1, w2, s2, b2 = params
    N, Cin, H, W = x.shape
    Chid = w1.shape[-1]
    Cout = w2.shape[-1]
    has_residual = (Cin == Cout) and (stride == 1)

    w1_fold = (w1 * s1[None, None, None, :]).astype(jnp.bfloat16).astype(jnp.float32)
    w2_fold = (w2 * s2[None, :]).astype(jnp.bfloat16).astype(jnp.float32)
    xb = x.astype(jnp.bfloat16).astype(jnp.float32)

    y = lax.conv_general_dilated(
        xb, w1_fold, window_strides=(1, 1),
        padding=[(padding, padding), (padding, padding)],
        dimension_numbers=('NCHW', 'HWIO', 'NCHW'),
        precision=lax.Precision.HIGHEST)
    y = y + b1.reshape(1, Chid, 1, 1)
    y = jnp.maximum(y, 0.0)
    y = y.astype(jnp.bfloat16).astype(jnp.float32)
    y = lax.conv_general_dilated(
        y, w2_fold[None, None], window_strides=(1, 1), padding='VALID',
        dimension_numbers=('NCHW', 'HWIO', 'NCHW'),
        precision=lax.Precision.HIGHEST)
    y = y + b2.reshape(1, Cout, 1, 1)
    if has_residual:
        y = y + xb
    return y


def _init_params(key, in_channels, out_channels, kernel_size, exp_ratio=4.0, eps=1e-5):
    hidden = make_divisible(in_channels * exp_ratio)
    ks = jax.random.split(key, 10)
    w1 = 0.1 * jax.random.normal(ks[0], (kernel_size, kernel_size, in_channels, hidden),
                                 dtype=jnp.float32)
    w2 = 0.1 * jax.random.normal(ks[1], (hidden, out_channels), dtype=jnp.float32)
    g1 = 1.0 + 0.1 * jax.random.normal(ks[2], (hidden,), dtype=jnp.float32)
    beta1 = 0.1 * jax.random.normal(ks[3], (hidden,), dtype=jnp.float32)
    mean1 = 0.1 * jax.random.normal(ks[4], (hidden,), dtype=jnp.float32)
    var1 = jnp.abs(jax.random.normal(ks[5], (hidden,), dtype=jnp.float32)) + 0.5
    s1 = g1 / jnp.sqrt(var1 + eps)
    b1 = beta1 - mean1 * s1
    g2 = 1.0 + 0.1 * jax.random.normal(ks[6], (out_channels,), dtype=jnp.float32)
    beta2 = 0.1 * jax.random.normal(ks[7], (out_channels,), dtype=jnp.float32)
    mean2 = 0.1 * jax.random.normal(ks[8], (out_channels,), dtype=jnp.float32)
    var2 = jnp.abs(jax.random.normal(ks[9], (out_channels,), dtype=jnp.float32)) + 0.5
    s2 = g2 / jnp.sqrt(var2 + eps)
    b2 = beta2 - mean2 * s2
    return (w1, s1, b1, w2, s2, b2), hidden


if __name__ == "__main__":
    key = jax.random.PRNGKey(0)

    def run_case(case_key, *, N, Cin, Cout, H, W, K, pad):
        k_x, k_p = jax.random.split(case_key)
        params, _ = _init_params(k_p, Cin, Cout, K)
        x = jax.random.normal(k_x, (N, Cin, H, W), dtype=jnp.float32)
        out = fused_mbconv(x, params, kernel_size=K, stride=1, padding=pad)
        out = jax.block_until_ready(out)
        ref = _reference_forward(x, params, kernel_size=K, stride=1, padding=pad)
        ref = jax.block_until_ready(ref)
        assert out.shape == (N, Cout, H, W), out.shape
        max_err = float(jnp.max(jnp.abs(out - ref)))
        assert jnp.allclose(out, ref, rtol=2e-3, atol=2e-3), max_err

    keys = jax.random.split(key, 3)
    # Primary config (residual path); Nb=1, grid=2 keeps both v7x TensorCores busy.
    run_case(keys[0], N=2, Cin=4, Cout=4, H=16, W=16, K=3, pad=1)
    # Nb=2 batching + K=5 / pad=2 + non-square H != W (exercises halo/mask generality).
    run_case(keys[1], N=4, Cin=6, Cout=6, H=8, W=16, K=5, pad=2)
    # No-residual path (Cin != Cout).
    run_case(keys[2], N=2, Cin=4, Cout=8, H=16, W=16, K=3, pad=1)

    print("KERNEL_OK")
</pallas_src>

<mosaic_0001>
module attributes {stable_mosaic.version = 11 : i64} {
  func.func @_fused_mbconv_kernel(%arg0: i32, %arg1: memref<1x4x256xf32, #tpu.memory_space<vmem>>, %arg2: memref<16x144xbf16, #tpu.memory_space<vmem>>, %arg3: memref<16x1xf32, #tpu.memory_space<vmem>>, %arg4: memref<4x16xbf16, #tpu.memory_space<vmem>>, %arg5: memref<4x1xf32, #tpu.memory_space<vmem>>, %arg6: memref<1x4x256xf32, #tpu.memory_space<vmem>>, %arg7: memref<1x16x290xbf16, #tpu.memory_space<vmem>>) attributes {dimension_semantics = [#tpu.dimension_semantics<parallel>], iteration_bounds = array<i64: 2>, scalar_prefetch = 0 : i64, scratch_operands = 1 : i64, tpu.core_type = #tpu.core_type<tc>, window_params = [{transform_indices = @transform_0, window_bounds = array<i64: 1, 4, 256>}, {pipeline_mode = #tpu.pipeline_mode<synchronous>, transform_indices = @transform_1, window_bounds = array<i64: 16, 144>}, {pipeline_mode = #tpu.pipeline_mode<synchronous>, transform_indices = @transform_2, window_bounds = array<i64: 16, 1>}, {pipeline_mode = #tpu.pipeline_mode<synchronous>, transform_indices = @transform_3, window_bounds = array<i64: 4, 16>}, {pipeline_mode = #tpu.pipeline_mode<synchronous>, transform_indices = @transform_4, window_bounds = array<i64: 4, 1>}, {transform_indices = @transform_5, window_bounds = array<i64: 1, 4, 256>}]} {
    %cst = arith.constant 0.000000e+00 : bf16
    %0 = vector.broadcast %cst : bf16 to vector<1x16x290xbf16>
    %c0 = arith.constant 0 : index
    %c0_0 = arith.constant 0 : index
    %c0_1 = arith.constant 0 : index
    %1 = vector.load %arg7[%c0, %c0_0, %c0_1] : memref<1x16x290xbf16, #tpu.memory_space<vmem>>, vector<1x16x290xbf16>
    tpu.vector_store %arg7[%c0, %c0_0, %c0_1], %0 {strides = array<i32>} : memref<1x16x290xbf16, #tpu.memory_space<vmem>>, vector<1x16x290xbf16>,
    %c0_2 = arith.constant 0 : index
    %c0_3 = arith.constant 0 : index
    %c0_4 = arith.constant 0 : index
    %2 = vector.load %arg1[%c0_2, %c0_3, %c0_4] : memref<1x4x256xf32, #tpu.memory_space<vmem>>, vector<1x4x256xf32>
    %3 = vector.shape_cast %2 : vector<1x4x256xf32> to vector<4x256xf32>
    %4 = arith.truncf %3 : vector<4x256xf32> to vector<4x256xbf16>
    %c0_5 = arith.constant 0 : index
    %c0_6 = arith.constant 0 : index
    %c17 = arith.constant 17 : index
    %5 = vector.load %arg7[%c0_5, %c0_6, %c17] : memref<1x16x290xbf16, #tpu.memory_space<vmem>>, vector<1x4x256xbf16>
    %6 = vector.shape_cast %5 : vector<1x4x256xbf16> to vector<4x256xbf16>
    %7 = vector.shape_cast %4 : vector<4x256xbf16> to vector<1x4x256xbf16>
    tpu.vector_store %arg7[%c0_5, %c0_6, %c17], %7 {strides = array<i32>} : memref<1x16x290xbf16, #tpu.memory_space<vmem>>, vector<1x4x256xbf16>,
    %8 = tpu.iota {dimensions = array<i32: 1>} : vector<16x256xi32>
    %c16_i32 = arith.constant 16 : i32
    %c0_i32 = arith.constant 0 : i32
    %9 = arith.cmpi eq, %c16_i32, %c0_i32 : i32
    %c1_i32 = arith.constant 1 : i32
    %10 = arith.select %9, %c1_i32, %c16_i32 : i32
    %11 = vector.broadcast %10 : i32 to vector<16x256xi32>
    %12 = arith.remsi %8, %11 : vector<16x256xi32>
    %c0_i32_7 = arith.constant 0 : i32
    %13 = vector.broadcast %c0_i32_7 : i32 to vector<16x256xi32>
    %14 = arith.cmpi ne, %12, %13 : vector<16x256xi32>
    %c0_i32_8 = arith.constant 0 : i32
    %15 = vector.broadcast %c0_i32_8 : i32 to vector<16x256xi32>
    %16 = arith.cmpi slt, %12, %15 : vector<16x256xi32>
    %c0_i32_9 = arith.constant 0 : i32
    %17 = arith.cmpi slt, %10, %c0_i32_9 : i32
    %18 = vector.broadcast %17 : i1 to vector<16x256xi1>
    %19 = vector.broadcast %18 : vector<16x256xi1> to vector<16x256xi1>
    %20 = arith.xori %16, %19 : vector<16x256xi1>
    %21 = arith.andi %20, %14 : vector<16x256xi1>
    %22 = vector.broadcast %10 : i32 to vector<16x256xi32>
    %23 = arith.addi %12, %22 : vector<16x256xi32>
    %24 = arith.select %21, %23, %12 : vector<16x256xi1>, vector<16x256xi32>
    %cst_10 = arith.constant 0.000000e+00 : bf16
    %25 = vector.broadcast %cst_10 : bf16 to vector<16x256xbf16>
    %c1_i32_11 = arith.constant 1 : i32
    %26 = vector.broadcast %c1_i32_11 : i32 to vector<16x256xi32>
    %27 = arith.cmpi sge, %24, %26 : vector<16x256xi32>
    %c15_i32 = arith.constant 15 : i32
    %28 = vector.broadcast %c15_i32 : i32 to vector<16x256xi32>
    %29 = arith.cmpi slt, %24, %28 : vector<16x256xi32>
    %c0_12 = arith.constant 0 : index
    %c0_13 = arith.constant 0 : index
    %c0_14 = arith.constant 0 : index
    %30 = vector.load %arg7[%c0_12, %c0_13, %c0_14] : memref<1x16x290xbf16, #tpu.memory_space<vmem>>, vector<1x16x256xbf16>
    %31 = vector.shape_cast %30 : vector<1x16x256xbf16> to vector<16x256xbf16>
    %32 = arith.select %27, %31, %25 : vector<16x256xi1>, vector<16x256xbf16>
    %c0_15 = arith.constant 0 : index
    %c0_16 = arith.constant 0 : index
    %c1 = arith.constant 1 : index
    %33 = vector.load %arg7[%c0_15, %c0_16, %c1] : memref<1x16x290xbf16, #tpu.memory_space<vmem>>, vector<1x16x256xbf16>
    %34 = vector.shape_cast %33 : vector<1x16x256xbf16> to vector<16x256xbf16>
    %c0_17 = arith.constant 0 : index
    %c0_18 = arith.constant 0 : index
    %c2 = arith.constant 2 : index
    %35 = vector.load %arg7[%c0_17, %c0_18, %c2] : memref<1x16x290xbf16, #tpu.memory_space<vmem>>, vector<1x16x256xbf16>
    %36 = vector.shape_cast %35 : vector<1x16x256xbf16> to vector<16x256xbf16>
    %37 = arith.select %29, %36, %25 : vector<16x256xi1>, vector<16x256xbf16>
    %c0_19 = arith.constant 0 : index
    %c0_20 = arith.constant 0 : index
    %c16 = arith.constant 16 : index
    %38 = vector.load %arg7[%c0_19, %c0_20, %c16] : memref<1x16x290xbf16, #tpu.memory_space<vmem>>, vector<1x16x256xbf16>
    %39 = vector.shape_cast %38 : vector<1x16x256xbf16> to vector<16x256xbf16>
    %40 = arith.select %27, %39, %25 : vector<16x256xi1>, vector<16x256xbf16>
    %c0_21 = arith.constant 0 : index
    %c0_22 = arith.constant 0 : index
    %c17_23 = arith.constant 17 : index
    %41 = vector.load %arg7[%c0_21, %c0_22, %c17_23] : memref<1x16x290xbf16, #tpu.memory_space<vmem>>, vector<1x16x256xbf16>
    %42 = vector.shape_cast %41 : vector<1x16x256xbf16> to vector<16x256xbf16>
    %c0_24 = arith.constant 0 : index
    %c0_25 = arith.constant 0 : index
    %c18 = arith.constant 18 : index
    %43 = vector.load %arg7[%c0_24, %c0_25, %c18] : memref<1x16x290xbf16, #tpu.memory_space<vmem>>, vector<1x16x256xbf16>
    %44 = vector.shape_cast %43 : vector<1x16x256xbf16> to vector<16x256xbf16>
    %45 = arith.select %29, %44, %25 : vector<16x256xi1>, vector<16x256xbf16>
    %c0_26 = arith.constant 0 : index
    %c0_27 = arith.constant 0 : index
    %c32 = arith.constant 32 : index
    %46 = vector.load %arg7[%c0_26, %c0_27, %c32] : memref<1x16x290xbf16, #tpu.memory_space<vmem>>, vector<1x16x256xbf16>
    %47 = vector.shape_cast %46 : vector<1x16x256xbf16> to vector<16x256xbf16>
    %48 = arith.select %27, %47, %25 : vector<16x256xi1>, vector<16x256xbf16>
    %c0_28 = arith.constant 0 : index
    %c0_29 = arith.constant 0 : index
    %c33 = arith.constant 33 : index
    %49 = vector.load %arg7[%c0_28, %c0_29, %c33] : memref<1x16x290xbf16, #tpu.memory_space<vmem>>, vector<1x16x256xbf16>
    %50 = vector.shape_cast %49 : vector<1x16x256xbf16> to vector<16x256xbf16>
    %c0_30 = arith.constant 0 : index
    %c0_31 = arith.constant 0 : index
    %c34 = arith.constant 34 : index
    %51 = vector.load %arg7[%c0_30, %c0_31, %c34] : memref<1x16x290xbf16, #tpu.memory_space<vmem>>, vector<1x16x256xbf16>
    %52 = vector.shape_cast %51 : vector<1x16x256xbf16> to vector<16x256xbf16>
    %53 = arith.select %29, %52, %25 : vector<16x256xi1>, vector<16x256xbf16>
    %54 = tpu.concatenate %32, %34, %37, %40, %42, %45, %48, %50, %53 in 0 : vector<16x256xbf16>, vector<16x256xbf16>, vector<16x256xbf16>, vector<16x256xbf16>, vector<16x256xbf16>, vector<16x256xbf16>, vector<16x256xbf16>, vector<16x256xbf16>, vector<16x256xbf16> -> vector<144x256xbf16>
    %c0_32 = arith.constant 0 : index
    %c0_33 = arith.constant 0 : index
    %55 = vector.load %arg2[%c0_32, %c0_33] : memref<16x144xbf16, #tpu.memory_space<vmem>>, vector<16x144xbf16>
    %cst_34 = arith.constant dense<0.000000e+00> : vector<16x256xf32>
    %56 = tpu.matmul %55, %54, %cst_34 {dimension_numbers = #tpu.dot_dimension_numbers<[1], [0], [0], [1], [0, 0, 1, 1], [], []>} : vector<16x144xbf16>, vector<144x256xbf16>, vector<16x256xf32> -> vector<16x256xf32>
    %c0_35 = arith.constant 0 : index
    %c0_36 = arith.constant 0 : index
    %57 = vector.load %arg3[%c0_35, %c0_36] : memref<16x1xf32, #tpu.memory_space<vmem>>, vector<16x1xf32>
    %58 = vector.broadcast %57 : vector<16x1xf32> to vector<16x256xf32>
    %59 = arith.addf %56, %58 : vector<16x256xf32>
    %cst_37 = arith.constant 0.000000e+00 : f32
    %60 = vector.broadcast %cst_37 : f32 to vector<16x256xf32>
    %61 = arith.maximumf %59, %60 : vector<16x256xf32>
    %c0_38 = arith.constant 0 : index
    %c0_39 = arith.constant 0 : index
    %62 = vector.load %arg4[%c0_38, %c0_39] : memref<4x16xbf16, #tpu.memory_space<vmem>>, vector<4x16xbf16>
    %63 = arith.truncf %61 : vector<16x256xf32> to vector<16x256xbf16>
    %cst_40 = arith.constant dense<0.000000e+00> : vector<4x256xf32>
    %64 = tpu.matmul %62, %63, %cst_40 {dimension_numbers = #tpu.dot_dimension_numbers<[1], [0], [0], [1], [0, 0, 1, 1], [], []>} : vector<4x16xbf16>, vector<16x256xbf16>, vector<4x256xf32> -> vector<4x256xf32>
    %c0_41 = arith.constant 0 : index
    %c0_42 = arith.constant 0 : index
    %65 = vector.load %arg5[%c0_41, %c0_42] : memref<4x1xf32, #tpu.memory_space<vmem>>, vector<4x1xf32>
    %66 = vector.broadcast %65 : vector<4x1xf32> to vector<4x256xf32>
    %67 = arith.addf %64, %66 : vector<4x256xf32>
    %68 = vector.extract_strided_slice %54 {offsets = [64, 0], sizes = [4, 256], strides = [1, 1]} : vector<144x256xbf16> to vector<4x256xbf16>
    %69 = arith.extf %68 : vector<4x256xbf16> to vector<4x256xf32>
    %70 = arith.addf %67, %69 : vector<4x256xf32>
    %c0_43 = arith.constant 0 : index
    %c0_44 = arith.constant 0 : index
    %c0_45 = arith.constant 0 : index
    %71 = vector.load %arg6[%c0_43, %c0_44, %c0_45] : memref<1x4x256xf32, #tpu.memory_space<vmem>>, vector<1x4x256xf32>
    %72 = vector.shape_cast %71 : vector<1x4x256xf32> to vector<4x256xf32>
    %73 = vector.shape_cast %70 : vector<4x256xf32> to vector<1x4x256xf32>
    tpu.vector_store %arg6[%c0_43, %c0_44, %c0_45], %73 {strides = array<i32>} : memref<1x4x256xf32, #tpu.memory_space<vmem>>, vector<1x4x256xf32>,
    return
  }
  func.func @transform_0(%arg0: i32) -> (i32, i32, i32) {
    %c0_i32 = arith.constant 0 : i32
    %c0_i32_0 = arith.constant 0 : i32
    %c0_i32_1 = arith.constant 0 : i32
    return %arg0, %c0_i32, %c0_i32_0 : i32, i32, i32
  }
  func.func @transform_1(%arg0: i32) -> (i32, i32) {
    %c0_i32 = arith.constant 0 : i32
    %c0_i32_0 = arith.constant 0 : i32
    %c0_i32_1 = arith.constant 0 : i32
    return %c0_i32, %c0_i32_0 : i32, i32
  }
  func.func @transform_2(%arg0: i32) -> (i32, i32) {
    %c0_i32 = arith.constant 0 : i32
    %c0_i32_0 = arith.constant 0 : i32
    %c0_i32_1 = arith.constant 0 : i32
    return %c0_i32, %c0_i32_0 : i32, i32
  }
  func.func @transform_3(%arg0: i32) -> (i32, i32) {
    %c0_i32 = arith.constant 0 : i32
    %c0_i32_0 = arith.constant 0 : i32
    %c0_i32_1 = arith.constant 0 : i32
    return %c0_i32, %c0_i32_0 : i32, i32
  }
  func.func @transform_4(%arg0: i32) -> (i32, i32) {
    %c0_i32 = arith.constant 0 : i32
    %c0_i32_0 = arith.constant 0 : i32
    %c0_i32_1 = arith.constant 0 : i32
    return %c0_i32, %c0_i32_0 : i32, i32
  }
  func.func @transform_5(%arg0: i32) -> (i32, i32, i32) {
    %c0_i32 = arith.constant 0 : i32
    %c0_i32_0 = arith.constant 0 : i32
    %c0_i32_1 = arith.constant 0 : i32
    return %arg0, %c0_i32, %c0_i32_0 : i32, i32, i32
  }
}

</mosaic_0001>

<llo_original>
// kernel: tpu_custom_call.1
$region0: #{tpu_custom_call.1}
  #allocation0 [shape = 'u32[]', space=smem, size = 0x4, offset = 0x4, fixed_abs, tag = 'smem constant byte address 0x4 - core index']
  #allocation1 [shape = 'u32[72,128]{1,0:T(1,128)}', space=vmem, size = 0x9000, scoped, tag = 'internal scratch']
  #allocation2 [shape = 'bf16[1,16,290]{2,1,0:T(8,128)(2,1)}', space=vmem, size = 0x3000, scoped, tag = 'scratch operand']
  %s0 = inlined_call_operand.vmem [shape: f32[2,4,256], index: 0, kind: input, shape index: {}]
  %s1 = inlined_call_operand.hbm [shape: bf16[16,144], index: 1, kind: input, shape index: {}]
  %s2 = inlined_call_operand.vmem [shape: f32[16,1], index: 2, kind: input, shape index: {}]
  %s3 = inlined_call_operand.vmem [shape: bf16[4,16], index: 3, kind: input, shape index: {}]
  %s4 = inlined_call_operand.vmem [shape: f32[4,1], index: 4, kind: input, shape index: {}]
  %s5 = inlined_call_operand.hbm [shape: f32[2,4,256], index: 5, kind: output, shape index: {}]
  %s6 = sld [smem:[#allocation0]]
  $region57: #{tpu_custom_call.1} parent=0
    _
  %s8 = ssub.s32 1, %s6
  %s9 = scalar_select 0, %s8, %s6
  $region1: #{tpu_custom_call.1} parent=0
    #allocation3 [shape = 'u8[8192]{0}', space=vmem, size = 0x2000, scoped, tag = 'input window, operand 1, single buffered']
    #allocation4 [shape = 's32[2]{0}', space=sflag, size = 0x8, scoped, tag = 'scoped memory for tpu_custom_call.1']
    #allocation5 [shape = 's32[2]{0}', space=sflag, size = 0x8, scoped, tag = 'scoped memory for tpu_custom_call.1']
    #allocation6 [shape = 'u8[8192]{0}', space=vmem, size = 0x2000, scoped, tag = 'output window, operand 0']
    %10 = vsyncpa [#allocation4], 0
    %11 = vsyncpa [#allocation5], 0
    %s12 = scalar_lea.sflag [#allocation5], 1
    %13 = vsyncpa %s12, 0
    loop: start=0, step=1, limit=4
    $region2: #{tpu_custom_call.1} parent=1 // loop_pre_header
      _
    $region3: #{tpu_custom_call.1} parent=1 // loop_header
      %s15 = sphi 0, %s19
      %p16 = scmp.ge.s32.totalorder %s15, 4
      %s25 = sphi 0, %s27
      %s28 = sphi 0, %s25
      %s29 = sphi 0, %s28
      %s45 = sphi 0, %s29
      %s49 = sphi 0, %s49
      %s51 = sphi 0, %s49
      %s52 = sphi 0, %s51
      %s66 = sphi 0, %s52
      %s70 = sphi 0, %s70
      %s72 = sphi 0, %s70
      %s73 = sphi 0, %s72
      %s87 = sphi 0, %s73
      %s91 = sphi 0, %s91
      %s93 = sphi 0, %s91
      %s94 = sphi 0, %s93
      %s108 = sphi 0, %s94
      %s112 = sphi 0, %s112
      %s114 = sphi 0, %s112
      %s115 = sphi 0, %s114
      %s129 = sphi 0, %s115
      %s135 = sphi 0, %s137
      %s138 = sphi 0, %s135
      %s139 = sphi 0, %s138
      %s155 = sphi 0, %s139
    $region4: #{tpu_custom_call.1} parent=1 // loop_header_branch
      %18 = sbr.rel (%p16) target = $region8
    $region5: #{tpu_custom_call.1} parent=1 // loop_body
      %s20 = ssub.s32 %s15, 1
      %s21 = ssub.s32 %s15, 2
      %s22 = sadd.s32 %s15, 1
      %s23 = ssub.s32 %s15, %s22
      %p24 = scmp.eq.s32.totalorder %s23, 0
      %s26 = sadd.s32 %s25, 1
      %s27 = scalar_select %p24, %s25, %s26
      %p30 = pneg %p24
      %p31 = scmp.eq.s32.totalorder %s15, 1
      %p32 = por %p30, %p31
      %p33 = scmp.ne.s32.totalorder %s25, %s28
      %p34 = scmp.eq.s32.totalorder %s15, 0
      %p35 = por %p33, %p34
      %p36 = scmp.ne.s32.totalorder %s25, %s28
      %p37 = scmp.eq.s32.totalorder %s20, 1
      %p38 = por %p36, %p37
      %p39 = scmp.ne.s32.totalorder %s28, %s29
      %p40 = scmp.eq.s32.totalorder %s20, 0
      %p41 = por %p39, %p40
      %p42 = scmp.ne.s32.totalorder %s28, %s29
      %p43 = scmp.eq.s32.totalorder %s21, 1
      %p44 = por %p42, %p43
      %p46 = scmp.ne.s32.totalorder %s29, %s45
      %p47 = scmp.eq.s32.totalorder %s21, 0
      %p48 = por %p46, %p47
      %s50 = sadd.s32 %s49, 1
      %p53 = scmp.eq.s32.totalorder %s15, 1
      %p54 = scmp.ne.s32.totalorder %s49, %s51
      %p55 = scmp.eq.s32.totalorder %s15, 0
      %p56 = por %p54, %p55
      %p57 = scmp.ne.s32.totalorder %s49, %s51
      %p58 = scmp.eq.s32.totalorder %s20, 1
      %p59 = por %p57, %p58
      %p60 = scmp.ne.s32.totalorder %s51, %s52
      %p61 = scmp.eq.s32.totalorder %s20, 0
      %p62 = por %p60, %p61
      %p63 = scmp.ne.s32.totalorder %s51, %s52
      %p64 = scmp.eq.s32.totalorder %s21, 1
      %p65 = por %p63, %p64
      %p67 = scmp.ne.s32.totalorder %s52, %s66
      %p68 = scmp.eq.s32.totalorder %s21, 0
      %p69 = por %p67, %p68
      %s71 = sadd.s32 %s70, 1
      %p74 = scmp.eq.s32.totalorder %s15, 1
      %p75 = scmp.ne.s32.totalorder %s70, %s72
      %p76 = scmp.eq.s32.totalorder %s15, 0
      %p77 = por %p75, %p76
      %p78 = scmp.ne.s32.totalorder %s70, %s72
      %p79 = scmp.eq.s32.totalorder %s20, 1
      %p80 = por %p78, %p79
      %p81 = scmp.ne.s32.totalorder %s72, %s73
      %p82 = scmp.eq.s32.totalorder %s20, 0
      %p83 = por %p81, %p82
      %p84 = scmp.ne.s32.totalorder %s72, %s73
      %p85 = scmp.eq.s32.totalorder %s21, 1
      %p86 = por %p84, %p85
      %p88 = scmp.ne.s32.totalorder %s73, %s87
      %p89 = scmp.eq.s32.totalorder %s21, 0
      %p90 = por %p88, %p89
      %s92 = sadd.s32 %s91, 1
      %p95 = scmp.eq.s32.totalorder %s15, 1
      %p96 = scmp.ne.s32.totalorder %s91, %s93
      %p97 = scmp.eq.s32.totalorder %s15, 0
      %p98 = por %p96, %p97
      %p99 = scmp.ne.s32.totalorder %s91, %s93
      %p100 = scmp.eq.s32.totalorder %s20, 1
      %p101 = por %p99, %p100
      %p102 = scmp.ne.s32.totalorder %s93, %s94
      %p103 = scmp.eq.s32.totalorder %s20, 0
      %p104 = por %p102, %p103
      %p105 = scmp.ne.s32.totalorder %s93, %s94
      %p106 = scmp.eq.s32.totalorder %s21, 1
      %p107 = por %p105, %p106
      %p109 = scmp.ne.s32.totalorder %s94, %s108
      %p110 = scmp.eq.s32.totalorder %s21, 0
      %p111 = por %p109, %p110
      %s113 = sadd.s32 %s112, 1
      %p116 = scmp.eq.s32.totalorder %s15, 1
      %p117 = scmp.ne.s32.totalorder %s112, %s114
      %p118 = scmp.eq.s32.totalorder %s15, 0
      %p119 = por %p117, %p118
      %p120 = scmp.ne.s32.totalorder %s112, %s114
      %p121 = scmp.eq.s32.totalorder %s20, 1
      %p122 = por %p120, %p121
      %p123 = scmp.ne.s32.totalorder %s114, %s115
      %p124 = scmp.eq.s32.totalorder %s20, 0
      %p125 = por %p123, %p124
      %p126 = scmp.ne.s32.totalorder %s114, %s115
      %p127 = scmp.eq.s32.totalorder %s21, 1
      %p128 = por %p126, %p127
      %p130 = scmp.ne.s32.totalorder %s115, %s129
      %p131 = scmp.eq.s32.totalorder %s21, 0
      %p132 = por %p130, %p131
      %s133 = ssub.s32 %s15, %s22
      %p134 = scmp.eq.s32.totalorder %s133, 0
      %s136 = sadd.s32 %s135, 1
      %s137 = scalar_select %p134, %s135, %s136
      %p140 = pneg %p134
      %p141 = scmp.eq.s32.totalorder %s15, 1
      %p142 = por %p140, %p141
      %p143 = scmp.ne.s32.totalorder %s135, %s138
      %p144 = scmp.eq.s32.totalorder %s15, 0
      %p145 = por %p143, %p144
      %p146 = scmp.ne.s32.totalorder %s135, %s138
      %p147 = scmp.eq.s32.totalorder %s20, 1
      %p148 = por %p146, %p147
      %p149 = scmp.ne.s32.totalorder %s138, %s139
      %p150 = scmp.eq.s32.totalorder %s20, 0
      %p151 = por %p149, %p150
      %p152 = scmp.ne.s32.totalorder %s138, %s139
      %p153 = scmp.eq.s32.totalorder %s21, 1
      %p154 = por %p152, %p153
      %p156 = scmp.ne.s32.totalorder %s139, %s155
      %p157 = scmp.eq.s32.totalorder %s21, 0
      %p158 = por %p156, %p157
      %p159 = scmp.le.s32.totalorder 1, %s15
      %p160 = scmp.lt.s32.totalorder %s15, 3
      %p161 = pnand %p159, %p160
      %p162 = pneg %p161
      // Predicated region
      $region9: #{tpu_custom_call.1} parent=5 // pred_check
        _
      $region10: #{tpu_custom_call.1} parent=5 // pred_check_branch
        %164 = sbr.rel (%p161) target = $region12
      $region11: #{tpu_custom_call.1} parent=5 // pred_region
        %s165 = ssub.s32 %s15, 1
        // Predicated region
        $region13: #{tpu_custom_call.1} parent=11 // pred_check
          %p166 = pneg %p62
        $region14: #{tpu_custom_call.1} parent=11 // pred_check_branch
          %168 = sbr.rel (%p166) target = $region16
        $region15: #{tpu_custom_call.1} parent=11 // pred_region
          %170 = vsyncadd [#allocation4], 0
          %s171 = sshll.u32 %s1, 4
          %s172 = int_to_ptr.hbm [resolvable:$true] %s171
          %s173 = sshll.u32 [#allocation3], 4
          %s174 = int_to_ptr.vmem [resolvable:$true] %s173
          %179 = dma.hbm_to_vmem [thread:$0]  %s172, 256, %s174, [#allocation4], 128, 128, 8
        $region16: #{tpu_custom_call.1} parent=11 // pred_fallthru
          _
        // Predicated region
        $region17: #{tpu_custom_call.1} parent=11 // pred_check
          %p180 = pneg %p83
        $region18: #{tpu_custom_call.1} parent=11 // pred_check_branch
          %182 = sbr.rel (%p180) target = $region20
        $region19: #{tpu_custom_call.1} parent=11 // pred_region
          _
        $region20: #{tpu_custom_call.1} parent=11 // pred_fallthru
          _
        // Predicated region
        $region21: #{tpu_custom_call.1} parent=11 // pred_check
          %p183 = pneg %p104
        $region22: #{tpu_custom_call.1} parent=11 // pred_check_branch
          %185 = sbr.rel (%p183) target = $region24
        $region23: #{tpu_custom_call.1} parent=11 // pred_region
          _
        $region24: #{tpu_custom_call.1} parent=11 // pred_fallthru
          _
        // Predicated region
        $region25: #{tpu_custom_call.1} parent=11 // pred_check
          %p186 = pneg %p125
        $region26: #{tpu_custom_call.1} parent=11 // pred_check_branch
          %188 = sbr.rel (%p186) target = $region28
        $region27: #{tpu_custom_call.1} parent=11 // pred_region
          _
        $region28: #{tpu_custom_call.1} parent=11 // pred_fallthru
          _
      $region12: #{tpu_custom_call.1} parent=5 // pred_fallthru
        _
      %p189 = scmp.lt.s32.totalorder %s15, 2
      // Predicated region
      $region29: #{tpu_custom_call.1} parent=5 // pred_check
        %p190 = pneg %p189
      $region30: #{tpu_custom_call.1} parent=5 // pred_check_branch
        %192 = sbr.rel (%p190) target = $region32
      $region31: #{tpu_custom_call.1} parent=5 // pred_region
        // Predicated region
        $region33: #{tpu_custom_call.1} parent=31 // pred_check
          %p193 = pneg %p35
        $region34: #{tpu_custom_call.1} parent=31 // pred_check_branch
          %195 = sbr.rel (%p193) target = $region36
        $region35: #{tpu_custom_call.1} parent=31 // pred_region
          %p196 = scmp.lt.s32.totalorder %s15, 1
          %s197 = scalar_select %p196, %s15, 1
          %s198 = smul.addr %s197, 2
          %s199 = smul.addr %s198, 4
          %s200 = scalar_lea.vmem %s0, %s199
        $region36: #{tpu_custom_call.1} parent=31 // pred_fallthru
          _
      $region32: #{tpu_custom_call.1} parent=5 // pred_fallthru
        _
      %p201 = scmp.le.s32.totalorder 1, %s15
      %p202 = scmp.lt.s32.totalorder %s15, 3
      %p203 = pnand %p201, %p202
      %p204 = pneg %p203
      // Predicated region
      $region37: #{tpu_custom_call.1} parent=5 // pred_check
        _
      $region38: #{tpu_custom_call.1} parent=5 // pred_check_branch
        %206 = sbr.rel (%p203) target = $region40
      $region39: #{tpu_custom_call.1} parent=5 // pred_region
        %s207 = ssub.s32 %s15, 1
        // Predicated region
        $region41: #{tpu_custom_call.1} parent=39 // pred_check
          %p208 = pneg %p62
        $region42: #{tpu_custom_call.1} parent=39 // pred_check_branch
          %210 = sbr.rel (%p208) target = $region44
        $region43: #{tpu_custom_call.1} parent=39 // pred_region
          %212 = dma.done [#allocation4], 256
        $region44: #{tpu_custom_call.1} parent=39 // pred_fallthru
          _
        %p213 = scmp.lt.s32.totalorder %s20, 1
        %s214 = scalar_select %p213, %s20, 1
        %s215 = smul.addr %s214, 2
        %s216 = smul.addr %s215, 4
        %s217 = scalar_lea.vmem %s0, %s216
        %p218 = pneg %p41
        %p219 = pneg %p38
        %p220 = pneg %p62
        %p221 = pneg %p59
        %p222 = pneg %p83
        %p223 = pneg %p80
        %p224 = pneg %p104
        %p225 = pneg %p101
        %p226 = pneg %p125
        %p227 = pneg %p122
        %p228 = pneg %p151
        %p229 = pneg %p148
        %s230 = sand.u32 %s138, 1
        %s231 = scalar_lea.sflag [#allocation5], %s230
        %s232 = sand.u32 %s138, 1
        %s233 = smul.addr %s232, 8
        %s234 = scalar_lea.vmem [#allocation6], %s233
        %p235 = scmp.lt.s32.totalorder %s20, 1
        %s236 = scalar_select %p235, %s20, 1
        %s237 = smul.addr %s236, 2
        %s238 = smul.addr %s237, 4
        %s239 = scalar_lea.vmem %s0, %s238
        %243 = vst [vmem:[#allocation2] sm:$0xff] 0
        %vm244 = vcmask 273408
        %245 = vst.msk [vmem:[#allocation2 + $0x8] sm:$0xf] %vm244, 0
        %246 = vst [vmem:[#allocation2 + $0xc] sm:$0xff] 0
        %247 = vst.msk [vmem:[#allocation2 + $0x14] sm:$0xf] %vm244, 0
        %v248 = vld [vmem:[%s239] sm:$0xff]
        %250 = vst [vmem:[#allocation1] ss:$2 sm:$0xff] %v248
        %v251 = vld.sshfl [vmem:[#allocation1] sm:$0xff pattern:$0x75316420]
        %v252 = vld.sshfl [vmem:[#allocation1 + $0x8] sm:$0xff pattern:$0x75316420]
        %v255 = vpack.c.bf16 %v252, %v251
        %257 = vrot.lane.b32.xlu0 %v255, 17
        %v258 = vpop.permute.xlu0 %257
        %v259 = vrot.slane %v258, 4
        %vm260 = vcmask 138240
        %v261 = vsel %vm260, %v259, %v258
        %vm264 = vcmask 1041544
        %vm265 = vcmask 1045508
        %vm266 = vmor %vm265, %vm264
        %267 = vst.msk [vmem:[#allocation2] sm:$0x33] %vm266, %v261
        %vm268 = vcmask 132096
        %269 = vst.msk [vmem:[#allocation2 + $0x8] sm:$0x3] %vm268, %v259
        %v270 = vlaneseq
        %v271 = vand.u32 %v270, 127
        %v272 = vadd.s32 %v271, 128
        %vm273 = vcmp.lt.s32.totalorder %v271, 0
        %v274 = vsub.s32 0, %v271
        %v275 = vsel %vm273, %v274, %v271
        %v276 = vshrl.u32 %v275, 4
        %v277 = vand.u32 %v275, 15
        %v278 = vsub.s32 0, %v277
        %v279 = vsel %vm273, %v278, %v277
        %vm280 = vcmp.lt.s32.totalorder %v272, 0
        %v281 = vsub.s32 0, %v272
        %v282 = vsel %vm280, %v281, %v272
        %v283 = vshrl.u32 %v282, 4
        %v284 = vand.u32 %v282, 15
        %v285 = vsub.s32 0, %v284
        %v286 = vsel %vm280, %v285, %v284
        %vm287 = vcmp.ne.s32.totalorder %v279, 0
        %vm288 = vcmp.ne.s32.totalorder %v286, 0
        %vm289 = vcmp.lt.s32.totalorder %v279, 0
        %vm290 = vcmp.lt.s32.totalorder %v286, 0
        %vm291 = vmand %vm289, %vm287
        %vm292 = vmand %vm290, %vm288
        %v293 = vadd.s32 %v279, 16
        %v294 = vadd.s32 %v286, 16
        %v295 = vsel %vm291, %v293, %v279
        %v296 = vsel %vm292, %v294, %v286
        %vm297 = vcmp.ge.s32.totalorder %v295, 1
        %vm298 = vcmp.ge.s32.totalorder %v296, 1
        %vm299 = vcmp.lt.s32.totalorder %v295, 15
        %vm300 = vcmp.lt.s32.totalorder %v296, 15
        %v301 = vld [vmem:[#allocation2] sm:$0xff]
        %v302 = vld [vmem:[#allocation2 + $0xc] sm:$0xff]
        %vm303 = vmpackc.low %vm298, %vm297
        %v304 = vsel %vm303, %v301, 0
        %v305 = vsel %vm303, %v302, 0
        %v306 = vld [vmem:[#allocation2 + $0x8] sm:$0xf]
        %v307 = vld [vmem:[#allocation2 + $0x14] sm:$0xf]
        %vm308 = vmpackc.low %vm300, %vm299
        %v309 = vsel %vm308, 65537, 0
        %310 = vrot.lane.b32.xlu0 %v309, 2
        %v311 = vpop.permute.xlu0 %310
        %v312 = vrot.slane %v311, 4
        %vm313 = vcmask 15360
        %v314 = vsel %vm313, %v312, %v311
        %v315 = vunpack.c.l.b16 %v314
        %v316 = vunpack.c.h.b16 %v314
        %v317 = vunpack.c.l.b16 0
        %v318 = vunpack.c.h.b16 0
        %vm319 = vcmp.ne.s32.totalorder %v315, %v317
        %vm320 = vcmp.ne.s32.totalorder %v316, %v318
        %vm321 = vmpackc.low %vm320, %vm319
        %v322 = vunpack.c.l.b16 %v312
        %v323 = vunpack.c.h.b16 %v312
        %v324 = vunpack.c.l.b16 0
        %v325 = vunpack.c.h.b16 0
        %vm326 = vcmp.ne.s32.totalorder %v322, %v324
        %vm327 = vcmp.ne.s32.totalorder %v323, %v325
        %vm328 = vmpackc.low %vm327, %vm326
        %v329 = vsel %vm321, %v301, 0
        %v330 = vsel %vm328, %v306, 0
        %v331 = vsel %vm321, %v302, 0
        %v332 = vsel %vm328, %v307, 0
        %v333 = vsel %vm303, 65537, 0
        %334 = vrot.lane.b32.xlu0 %v333, 16
        %v335 = vpop.permute.xlu0 %334
        %v336 = vrot.slane %v335, 4
        %vm337 = vcmask 130048
        %v338 = vsel %vm337, %v336, %v335
        %v339 = vunpack.c.l.b16 %v338
        %v340 = vunpack.c.h.b16 %v338
        %v341 = vunpack.c.l.b16 0
        %v342 = vunpack.c.h.b16 0
        %vm343 = vcmp.ne.s32.totalorder %v339, %v341
        %vm344 = vcmp.ne.s32.totalorder %v340, %v342
        %vm345 = vmpackc.low %vm344, %vm343
        %v346 = vunpack.c.l.b16 %v336
        %v347 = vunpack.c.h.b16 %v336
        %v348 = vunpack.c.l.b16 0
        %v349 = vunpack.c.h.b16 0
        %vm350 = vcmp.ne.s32.totalorder %v346, %v348
        %vm351 = vcmp.ne.s32.totalorder %v347, %v349
        %vm352 = vmpackc.low %vm351, %vm350
        %v353 = vsel %vm345, %v301, 0
        %v354 = vsel %vm352, %v306, 0
        %v355 = vsel %vm345, %v302, 0
        %v356 = vsel %vm352, %v307, 0
        %357 = vrot.lane.b32.xlu0 %v309, 18
        %v358 = vpop.permute.xlu0 %357
        %v359 = vrot.slane %v358, 4
        %vm360 = vcmask 146432
        %v361 = vsel %vm360, %v359, %v358
        %v362 = vunpack.c.l.b16 %v361
        %v363 = vunpack.c.h.b16 %v361
        %v364 = vunpack.c.l.b16 0
        %v365 = vunpack.c.h.b16 0
        %vm366 = vcmp.ne.s32.totalorder %v362, %v364
        %vm367 = vcmp.ne.s32.totalorder %v363, %v365
        %vm368 = vmpackc.low %vm367, %vm366
        %v369 = vunpack.c.l.b16 %v359
        %v370 = vunpack.c.h.b16 %v359
        %v371 = vunpack.c.l.b16 0
        %v372 = vunpack.c.h.b16 0
        %vm373 = vcmp.ne.s32.totalorder %v369, %v371
        %vm374 = vcmp.ne.s32.totalorder %v370, %v372
        %vm375 = vmpackc.low %vm374, %vm373
        %v376 = vsel %vm368, %v301, 0
        %v377 = vsel %vm375, %v306, 0
        %v378 = vsel %vm368, %v302, 0
        %v379 = vsel %vm375, %v307, 0
        %380 = vrot.lane.b32.xlu0 %v333, 32
        %v381 = vpop.permute.xlu0 %380
        %v382 = vrot.slane %v381, 4
        %vm383 = vcmask 261120
        %v384 = vsel %vm383, %v382, %v381
        %v385 = vunpack.c.l.b16 %v384
        %v386 = vunpack.c.h.b16 %v384
        %v387 = vunpack.c.l.b16 0
        %v388 = vunpack.c.h.b16 0
        %vm389 = vcmp.ne.s32.totalorder %v385, %v387
        %vm390 = vcmp.ne.s32.totalorder %v386, %v388
        %vm391 = vmpackc.low %vm390, %vm389
        %v392 = vunpack.c.l.b16 %v382
        %v393 = vunpack.c.h.b16 %v382
        %v394 = vunpack.c.l.b16 0
        %v395 = vunpack.c.h.b16 0
        %vm396 = vcmp.ne.s32.totalorder %v392, %v394
        %vm397 = vcmp.ne.s32.totalorder %v393, %v395
        %vm398 = vmpackc.low %vm397, %vm396
        %v399 = vsel %vm391, %v301, 0
        %v400 = vsel %vm398, %v306, 0
        %v401 = vsel %vm391, %v302, 0
        %v402 = vsel %vm398, %v307, 0
        %403 = vrot.lane.b32.xlu0 %v309, 34
        %v404 = vpop.permute.xlu0 %403
        %v405 = vrot.slane %v404, 4
        %vm406 = vcmask 277504
        %v407 = vsel %vm406, %v405, %v404
        %v408 = vunpack.c.l.b16 %v407
        %v409 = vunpack.c.h.b16 %v407
        %v410 = vunpack.c.l.b16 0
        %v411 = vunpack.c.h.b16 0
        %vm412 = vcmp.ne.s32.totalorder %v408, %v410
        %vm413 = vcmp.ne.s32.totalorder %v409, %v411
        %vm414 = vmpackc.low %vm413, %vm412
        %v415 = vunpack.c.l.b16 %v405
        %v416 = vunpack.c.h.b16 %v405
        %v417 = vunpack.c.l.b16 0
        %v418 = vunpack.c.h.b16 0
        %vm419 = vcmp.ne.s32.totalorder %v415, %v417
        %vm420 = vcmp.ne.s32.totalorder %v416, %v418
        %vm421 = vmpackc.low %vm420, %vm419
        %v422 = vsel %vm414, %v301, 0
        %v423 = vsel %vm421, %v306, 0
        %v424 = vsel %vm414, %v302, 0
        %v425 = vsel %vm421, %v307, 0
        %v428 = vunpack.c.l.b16 %v304
        %v429 = vunpack.c.h.b16 %v304
        %v430 = vunpack.c.l.b16 %v305
        %v431 = vunpack.c.h.b16 %v305
        %v432 = vpack.c.b16 %v430, %v428
        %v433 = vpack.c.b16 %v431, %v429
        %v440 = vunpack.c.l.b16 %v301
        %v441 = vunpack.c.h.b16 %v301
        %v442 = vunpack.c.l.b16 %v306
        %v443 = vunpack.c.l.b16 %v302
        %v444 = vunpack.c.h.b16 %v302
        %v445 = vunpack.c.l.b16 %v307
        %v446 = vpack.c.b16 %v443, %v440
        %v447 = vpack.c.b16 %v444, %v441
        %v448 = vpack.c.b16 %v445, %v442
        %449 = vrot.lane.b32.xlu0 %v446, 127
        %v450 = vpop.permute.xlu0 %449
        %451 = vrot.lane.b32.xlu0 %v447, 127
        %v452 = vpop.permute.xlu0 %451
        %453 = vrot.lane.b32.xlu0 %v448, 127
        %v454 = vpop.permute.xlu0 %453
        %vm455 = vcmask 1039360
        %v456 = vsel %vm455, %v450, %v452
        %v457 = vsel %vm455, %v452, %v454
        %v464 = vunpack.c.l.b16 %v329
        %v465 = vunpack.c.h.b16 %v329
        %v466 = vunpack.c.l.b16 %v330
        %v467 = vunpack.c.l.b16 %v331
        %v468 = vunpack.c.h.b16 %v331
        %v469 = vunpack.c.l.b16 %v332
        %v470 = vpack.c.b16 %v467, %v464
        %v471 = vpack.c.b16 %v468, %v465
        %v472 = vpack.c.b16 %v469, %v466
        %473 = vrot.lane.b32.xlu0 %v470, 126
        %v474 = vpop.permute.xlu0 %473
        %475 = vrot.lane.b32.xlu0 %v471, 126
        %v476 = vpop.permute.xlu0 %475
        %477 = vrot.lane.b32.xlu0 %v472, 126
        %v478 = vpop.permute.xlu0 %477
        %vm479 = vcmask 1031168
        %v480 = vsel %vm479, %v474, %v476
        %v481 = vsel %vm479, %v476, %v478
        %v488 = vunpack.c.l.b16 %v353
        %v489 = vunpack.c.h.b16 %v353
        %v490 = vunpack.c.l.b16 %v354
        %v491 = vunpack.c.l.b16 %v355
        %v492 = vunpack.c.h.b16 %v355
        %v493 = vunpack.c.l.b16 %v356
        %v494 = vpack.c.b16 %v491, %v488
        %v495 = vpack.c.b16 %v492, %v489
        %v496 = vpack.c.b16 %v493, %v490
        %497 = vrot.lane.b32.xlu0 %v494, 112
        %v498 = vpop.permute.xlu0 %497
        %499 = vrot.lane.b32.xlu0 %v495, 112
        %v500 = vpop.permute.xlu0 %499
        %501 = vrot.lane.b32.xlu0 %v496, 112
        %v502 = vpop.permute.xlu0 %501
        %vm503 = vcmask 916480
        %v504 = vsel %vm503, %v498, %v500
        %v505 = vsel %vm503, %v500, %v502
        %508 = vrot.lane.b32.xlu0 %v446, 111
        %v509 = vpop.permute.xlu0 %508
        %510 = vrot.lane.b32.xlu0 %v447, 111
        %v511 = vpop.permute.xlu0 %510
        %512 = vrot.lane.b32.xlu0 %v448, 111
        %v513 = vpop.permute.xlu0 %512
        %vm514 = vcmask 908288
        %v515 = vsel %vm514, %v509, %v511
        %v516 = vsel %vm514, %v511, %v513
        %v523 = vunpack.c.l.b16 %v376
        %v524 = vunpack.c.h.b16 %v376
        %v525 = vunpack.c.l.b16 %v377
        %v526 = vunpack.c.l.b16 %v378
        %v527 = vunpack.c.h.b16 %v378
        %v528 = vunpack.c.l.b16 %v379
        %v529 = vpack.c.b16 %v526, %v523
        %v530 = vpack.c.b16 %v527, %v524
        %v531 = vpack.c.b16 %v528, %v525
        %532 = vrot.lane.b32.xlu0 %v529, 110
        %v533 = vpop.permute.xlu0 %532
        %534 = vrot.lane.b32.xlu0 %v530, 110
        %v535 = vpop.permute.xlu0 %534
        %536 = vrot.lane.b32.xlu0 %v531, 110
        %v537 = vpop.permute.xlu0 %536
        %vm538 = vcmask 900096
        %v539 = vsel %vm538, %v533, %v535
        %v540 = vsel %vm538, %v535, %v537
        %v547 = vunpack.c.l.b16 %v399
        %v548 = vunpack.c.h.b16 %v399
        %v549 = vunpack.c.l.b16 %v400
        %v550 = vunpack.c.l.b16 %v401
        %v551 = vunpack.c.h.b16 %v401
        %v552 = vunpack.c.l.b16 %v402
        %v553 = vpack.c.b16 %v550, %v547
        %v554 = vpack.c.b16 %v551, %v548
        %v555 = vpack.c.b16 %v552, %v549
        %556 = vrot.lane.b32.xlu0 %v553, 96
        %v557 = vpop.permute.xlu0 %556
        %558 = vrot.lane.b32.xlu0 %v554, 96
        %v559 = vpop.permute.xlu0 %558
        %560 = vrot.lane.b32.xlu0 %v555, 96
        %v561 = vpop.permute.xlu0 %560
        %vm562 = vcmask 785408
        %v563 = vsel %vm562, %v557, %v559
        %v564 = vsel %vm562, %v559, %v561
        %567 = vrot.lane.b32.xlu0 %v446, 95
        %v568 = vpop.permute.xlu0 %567
        %569 = vrot.lane.b32.xlu0 %v447, 95
        %v570 = vpop.permute.xlu0 %569
        %571 = vrot.lane.b32.xlu0 %v448, 95
        %v572 = vpop.permute.xlu0 %571
        %vm573 = vcmask 777216
        %v574 = vsel %vm573, %v568, %v570
        %v575 = vsel %vm573, %v570, %v572
        %v582 = vunpack.c.l.b16 %v422
        %v583 = vunpack.c.h.b16 %v422
        %v584 = vunpack.c.l.b16 %v423
        %v585 = vunpack.c.l.b16 %v424
        %v586 = vunpack.c.h.b16 %v424
        %v587 = vunpack.c.l.b16 %v425
        %v588 = vpack.c.b16 %v585, %v582
        %v589 = vpack.c.b16 %v586, %v583
        %v590 = vpack.c.b16 %v587, %v584
        %591 = vrot.lane.b32.xlu0 %v588, 94
        %v592 = vpop.permute.xlu0 %591
        %593 = vrot.lane.b32.xlu0 %v589, 94
        %v594 = vpop.permute.xlu0 %593
        %595 = vrot.lane.b32.xlu0 %v590, 94
        %v596 = vpop.permute.xlu0 %595
        %vm597 = vcmask 769024
        %v598 = vsel %vm597, %v592, %v594
        %v599 = vsel %vm597, %v594, %v596
        %v602 = vld [vmem:[#allocation3] sm:$0xff]
        %v603 = vld [vmem:[#allocation3 + $0x8] sm:$0xff]
        %v604 = vld [vmem:[%s2] sm:$0xff]
        %v605 = vld [vmem:[%s2 + $0x8] sm:$0xff]
        %607 = vset.pattern.permute.xlu0 0
        %608 = vperm.xlu0 %607, %v604
        %v609 = vpop.permute.xlu0 %608
        %612 = vset.pattern.permute.xlu0 0
        %613 = vperm.xlu0 %612, %v605
        %v614 = vpop.permute.xlu0 %613
        %v618 = vunpack.c.l.b16 %v602
        %v619 = vunpack.c.h.b16 %v602
        %v620 = vunpack.c.l.b16 %v603
        %v621 = vunpack.c.h.b16 %v603
        %v622 = vpack.c.b16 %v620, %v618
        %v623 = vpack.c.b16 %v621, %v619
        %vm625 = vcmask 130048
        %v627 = vsel %vm625, %v623, 0
        %629 = vmatpush.bf16.msra.mxu0 %v574
        %630 = vmatpush.bf16.msra.mxu0 %v563
        %631 = vmatpush.bf16.msra.mxu0 %v539
        %632 = vmatpush.bf16.msra.mxu0 %v515
        %633 = vmatpush.bf16.msra.mxu0 %v504
        %634 = vmatpush.bf16.msra.mxu0 %v480
        %635 = vmatpush.bf16.msra.mxu0 %v456
        %636 = vmatpush.bf16.msra.mxu0 %v432
        %637 = vmatmul.bf16.gmra.mxu0 %v622
        %v638 = vpop.f32.mrf.mxu0
        %v639 = vadd.f32 %v609, %v638
        %v640 = vpop.f32.mrf.mxu0
        %v641 = vadd.f32 %v614, %v640
        %642 = vdwg.mxu0
        %643 = vmatpush.bf16.msra.mxu0 0
        %644 = vmatpush.bf16.msra.mxu0 0
        %645 = vmatpush.bf16.msra.mxu0 0
        %646 = vmatpush.bf16.msra.mxu0 0
        %647 = vmatpush.bf16.msra.mxu0 0
        %648 = vmatpush.bf16.msra.mxu0 0
        %649 = vmatpush.bf16.msra.mxu0 0
        %650 = vmatpush.bf16.msra.mxu0 %v598
        %651 = vmatmul.bf16.gmra.mxu0 %v627
        %v652 = vpop.f32.mrf.mxu0
        %v653 = vadd.f32 %v639, %v652
        %v654 = vpop.f32.mrf.mxu0
        %v655 = vadd.f32 %v641, %v654
        %656 = vdwg.mxu0
        %657 = vmatpush.bf16.msra.mxu0 %v575
        %658 = vmatpush.bf16.msra.mxu0 %v564
        %659 = vmatpush.bf16.msra.mxu0 %v540
        %660 = vmatpush.bf16.msra.mxu0 %v516
        %661 = vmatpush.bf16.msra.mxu0 %v505
        %662 = vmatpush.bf16.msra.mxu0 %v481
        %663 = vmatpush.bf16.msra.mxu0 %v457
        %664 = vmatpush.bf16.msra.mxu0 %v433
        %665 = vmatmul.bf16.gmra.mxu0 %v622
        %v666 = vpop.f32.mrf.mxu0
        %v667 = vadd.f32 %v609, %v666
        %v668 = vpop.f32.mrf.mxu0
        %v669 = vadd.f32 %v614, %v668
        %670 = vdwg.mxu0
        %671 = vmatpush.bf16.msra.mxu0 0
        %672 = vmatpush.bf16.msra.mxu0 0
        %673 = vmatpush.bf16.msra.mxu0 0
        %674 = vmatpush.bf16.msra.mxu0 0
        %675 = vmatpush.bf16.msra.mxu0 0
        %676 = vmatpush.bf16.msra.mxu0 0
        %677 = vmatpush.bf16.msra.mxu0 0
        %678 = vmatpush.bf16.msra.mxu0 %v599
        %679 = vmatmul.bf16.gmra.mxu0 %v627
        %v680 = vpop.f32.mrf.mxu0
        %v681 = vadd.f32 %v667, %v680
        %v682 = vpop.f32.mrf.mxu0
        %v683 = vadd.f32 %v669, %v682
        %684 = vdwg.mxu0
        %v685 = vmax.f32 %v653, 0.0
        %v686 = vmax.f32 %v681, 0.0
        %v687 = vmax.f32 %v655, 0.0
        %v688 = vmax.f32 %v683, 0.0
        %v689 = vld [vmem:[%s3] sm:$0x3]
        %v690 = vpack.c.bf16 %v687, %v685
        %v691 = vpack.c.bf16 %v688, %v686
        %v692 = vld [vmem:[%s4] sm:$0xf]
        %694 = vset.pattern.permute.xlu0 0
        %695 = vperm.xlu0 %694, %v692
        %v696 = vpop.permute.xlu0 %695
        %v699 = vsel %vm625, %v689, 0
        %701 = vmatpush.bf16.msra.mxu0 0
        %702 = vmatpush.bf16.msra.mxu0 0
        %703 = vmatpush.bf16.msra.mxu0 0
        %704 = vmatpush.bf16.msra.mxu0 0
        %705 = vmatpush.bf16.msra.mxu0 0
        %706 = vmatpush.bf16.msra.mxu0 0
        %707 = vmatpush.bf16.msra.mxu0 0
        %708 = vmatpush.bf16.msra.mxu0 %v690
        %709 = vmatmul.bf16.gmra.mxu0 %v699
        %v710 = vpop.f32.mrf.mxu0
        %v711 = vadd.f32 %v696, %v710
        %v712 = vpop.f32.mrf.mxu0
        %713 = vdwg.mxu0
        %714 = vmatpush.bf16.msra.mxu0 0
        %715 = vmatpush.bf16.msra.mxu0 0
        %716 = vmatpush.bf16.msra.mxu0 0
        %717 = vmatpush.bf16.msra.mxu0 0
        %718 = vmatpush.bf16.msra.mxu0 0
        %719 = vmatpush.bf16.msra.mxu0 0
        %720 = vmatpush.bf16.msra.mxu0 0
        %721 = vmatpush.bf16.msra.mxu0 %v691
        %722 = vmatmul.bf16.gmra.mxu0 %v699
        %v723 = vpop.f32.mrf.mxu0
        %v724 = vadd.f32 %v696, %v723
        %v725 = vpop.f32.mrf.mxu0
        %726 = vdwg.mxu0
        %v727 = vunpack.c.l.bf16 %v515
        %v728 = vunpack.c.l.bf16 %v516
        %v729 = vadd.f32 %v711, %v727
        %v730 = vadd.f32 %v724, %v728
        %v733 = vrot.slane %v730, 4
        %vm734 = vcmask 1043456
        %v735 = vsel %vm734, %v729, %v733
        %737 = vst [vmem:[%s234] sm:$0xff] %v735
        %s738 = sand.u32 %s138, 1
        %s739 = scalar_lea.sflag [#allocation5], %s738
        %s740 = sand.u32 %s138, 1
        %s741 = smul.addr %s740, 8
        %s742 = scalar_lea.vmem [#allocation6], %s741
        // Predicated region
        $region45: #{tpu_custom_call.1} parent=39 // pred_check
          %p743 = pneg %p148
        $region46: #{tpu_custom_call.1} parent=39 // pred_check_branch
          %745 = sbr.rel (%p743) target = $region48
        $region47: #{tpu_custom_call.1} parent=39 // pred_region
          %747 = vsyncadd %s739, 0
          %s748 = smul.addr %s20, 2
          %s749 = smul.addr %s748, 4
          %s750 = scalar_lea.hbm %s5, %s749
          %s752 = sshll.u32 %s742, 4
          %s753 = int_to_ptr.vmem [resolvable:$true] %s752
          %s754 = sshll.u32 %s750, 4
          %s755 = int_to_ptr.hbm [resolvable:$true] %s754
          %757 = dma.vmem_to_hbm [thread:$0]  %s753, 128, %s755, %s739
        $region48: #{tpu_custom_call.1} parent=39 // pred_fallthru
          _
      $region40: #{tpu_custom_call.1} parent=5 // pred_fallthru
        _
      %p758 = scmp.le.s32.totalorder 2, %s15
      // Predicated region
      $region49: #{tpu_custom_call.1} parent=5 // pred_check
        %p759 = pneg %p758
      $region50: #{tpu_custom_call.1} parent=5 // pred_check_branch
        %761 = sbr.rel (%p759) target = $region52
      $region51: #{tpu_custom_call.1} parent=5 // pred_region
        %s762 = ssub.s32 %s15, 2
        // Predicated region
        $region53: #{tpu_custom_call.1} parent=51 // pred_check
          %p763 = pneg %p154
        $region54: #{tpu_custom_call.1} parent=51 // pred_check_branch
          %765 = sbr.rel (%p763) target = $region56
        $region55: #{tpu_custom_call.1} parent=51 // pred_region
          %s766 = sand.u32 %s139, 1
          %s767 = scalar_lea.sflag [#allocation5], %s766
          %s768 = sand.u32 %s139, 1
          %s769 = smul.addr %s768, 8
          %s770 = scalar_lea.vmem [#allocation6], %s769
          %772 = dma.done %s767, 128
        $region56: #{tpu_custom_call.1} parent=51 // pred_fallthru
          _
      $region52: #{tpu_custom_call.1} parent=5 // pred_fallthru
        _
    $region6: #{tpu_custom_call.1} parent=1 // loop_footer
      %s19 = sadd.s32 1, %s15
    $region7: #{tpu_custom_call.1} parent=1 // loop_footer_branch
      %14 = sbr.rel target = $region3
    $region8: #{tpu_custom_call.1} parent=1 // loop_exit
      _
    %773 = vsyncpa [#allocation4], 1
    %s774 = scalar_lea.sflag [#allocation4], 1
    %775 = vsyncpa %s774, 1
    %776 = vsyncpa [#allocation5], 1
    %s777 = scalar_lea.sflag [#allocation5], 1
    %778 = vsyncpa %s777, 1

</llo_original>
